<compile_context>
chip_gen: v7x
topology: tpu7x:2x2x1
jax: 0.10.0
libtpu: 0.0.40
codegen_flags: <defaults>
</compile_context>

<pallas_src>
import functools

import jax
import jax.numpy as jnp
from jax.experimental import pallas as pl
from jax.experimental.pallas import tpu as pltpu

LANE = 128
SUBLANE = 8

# Budget for the double-buffered input tiles (2 inputs x 2 buffers).  12 MiB
# fits under the v5e 16 MiB scoped-VMEM default and leaves ample headroom on
# v6e / v7x, while making per-step DMA large enough to hide grid overhead.
_VMEM_INPUT_BUDGET = 12 << 20


def _dice_kernel(x_ref, y_ref, o_ref, *, valid_units, block_units, steps,
                 first_masked_block, mask_possible):
    c = pl.program_id(0)          # core split ("parallel" axis)
    i = pl.program_id(1)          # block step (reduction axis, "arbitrary")
    blk = c * steps + i           # logical block index

    @pl.when(i == 0)
    def _init():
        o_ref[...] = jnp.zeros_like(o_ref)

    def accumulate(apply_mask):
        # Stream the native dtype; upcast to f32 only for the partial sums
        # (v5e has no bf16 VPU path, so cast before any arithmetic).
        x = x_ref[...].astype(jnp.float32)
        y = y_ref[...].astype(jnp.float32)
        if apply_mask:
            # Mask by the *logical* block index so clamped phantom blocks and
            # the partial tail block contribute exactly zero.
            unit = blk * block_units + jax.lax.broadcasted_iota(
                jnp.int32, x.shape, 0)
            valid = unit < valid_units
            x = jnp.where(valid, x, 0.0)
            y = jnp.where(valid, y, 0.0)
        if x.ndim == 2:
            # Ragged-rows path: regroup (block_rows, 128) into (8,128) vreg
            # tiles (layout-preserving split of the sublane-major axis).
            g = block_units // SUBLANE
            x = x.reshape(g, SUBLANE, LANE)
            y = y.reshape(g, SUBLANE, LANE)
        # Reduce the leading axis with pure VPU adds into the resident
        # (8,128) accumulators (no per-step cross-lane reduce, no SMEM chain).
        o_ref[0, 0] += jnp.sum(x * y, axis=0)   # intersection partial
        o_ref[0, 1] += jnp.sum(x, axis=0)       # sum(inputs) partial
        o_ref[0, 2] += jnp.sum(y, axis=0)       # sum(targets) partial

    if mask_possible:
        # Only the tail / phantom blocks pay the iota+compare+select cost.
        @pl.when(blk >= first_masked_block)
        def _masked():
            accumulate(True)

        @pl.when(blk < first_masked_block)
        def _clean():
            accumulate(False)
    else:
        accumulate(False)


def _default_num_splits():
    # Splitting the row range over the leading "parallel" axis only pays off
    # on multi-TensorCore chips (v7x); on v5e/v6e it is a serial loop with an
    # extra output writeback, so default to 1 there.
    # TODO(synk): on v7x, verify the axis actually shards across both TCs
    # (otherwise switch it to pltpu.CORE_PARALLEL / pl.core_map).
    try:
        kind = jax.devices()[0].device_kind.lower()
    except Exception:
        return 1
    return 2 if "v7" in kind else 1


def dice_loss(inputs, targets, epsilon=1.0, *, block_rows=None,
              num_splits=None, min_pallas_elems=1 << 20):
    """Pallas implementation of DiceLoss.forward (returns scalar f32)."""
    x = inputs.reshape(-1)
    y = targets.reshape(-1)
    n = x.shape[0]
    eps = jnp.float32(epsilon)

    def finish(inter, sx, sy):
        dice = (2.0 * inter + eps) / (sx + sy + eps)
        return (1.0 - dice).astype(jnp.float32)

    # Small inputs: a fused XLA reduction beats the fixed pallas_call cost.
    if n < max(min_pallas_elems, SUBLANE * LANE):
        xf = x.astype(jnp.float32)
        yf = y.astype(jnp.float32)
        return finish(jnp.sum(xf * yf), jnp.sum(xf), jnp.sum(yf))

    inter = jnp.float32(0.0)
    sx = jnp.float32(0.0)
    sy = jnp.float32(0.0)

    rem = n % LANE
    rows = n // LANE
    if rem:
        # <128-element remainder summed here (no full padded copy in HBM).
        # TODO(synk): when n % 128 != 0 the x[:n-rem] slice feeding
        # pallas_call still materializes one copy of each input.
        xt = x[n - rem:].astype(jnp.float32)
        yt = y[n - rem:].astype(jnp.float32)
        inter += jnp.sum(xt * yt)
        sx += jnp.sum(xt)
        sy += jnp.sum(yt)
        x_main, y_main = x[:n - rem], y[:n - rem]
    else:
        x_main, y_main = x, y

    if rows % SUBLANE == 0:
        # Common case: pure reshape (no slice, no pad) to 3-D groups of
        # (8,128) tiles, so the kernel needs no reshape and usually no mask.
        total_units = rows // SUBLANE
        unit_rows = SUBLANE
        x2 = x_main.reshape(total_units, SUBLANE, LANE)
        y2 = y_main.reshape(total_units, SUBLANE, LANE)
        block_of = lambda bu: (bu, SUBLANE, LANE)
        index_of = lambda b: (b, 0, 0)
        align = 1
    else:
        # Ragged row count: keep 2-D (rows, 128) with no wrapper slice; the
        # partial tail block is masked in-kernel at row granularity.
        total_units = rows
        unit_rows = 1
        x2 = x_main.reshape(rows, LANE)
        y2 = y_main.reshape(rows, LANE)
        block_of = lambda bu: (bu, LANE)
        index_of = lambda b: (b, 0)
        align = SUBLANE

    bytes_per_unit = unit_rows * LANE * (x2.dtype.itemsize + y2.dtype.itemsize)
    budget_units = max(1, _VMEM_INPUT_BUDGET // (2 * bytes_per_unit))
    if block_rows is None:
        block_units = budget_units
    else:
        # Honor explicit requests but cap so double-buffered inputs stay
        # within the scoped-VMEM budget on every TPU generation.
        block_units = min(max(1, int(block_rows) // unit_rows), budget_units)
    block_units = max(align, (block_units // align) * align)
    max_block = max(align, (total_units // align) * align)
    block_units = min(block_units, max_block)

    total_blocks = pl.cdiv(total_units, block_units)
    if num_splits is None:
        num_splits = _default_num_splits()
    splits = num_splits if (num_splits > 1 and total_blocks >= num_splits) else 1
    steps = pl.cdiv(total_blocks, splits)

    first_masked_block = total_units // block_units   # blocks before this are fully valid
    mask_possible = (splits * steps) > first_masked_block

    def in_map(c, i):
        # Clamp so phantom trailing blocks (block count not divisible by the
        # split) re-read the last real block; they are fully masked in-kernel.
        return index_of(jnp.minimum(c * steps + i, total_blocks - 1))

    kernel = functools.partial(
        _dice_kernel, valid_units=total_units, block_units=block_units,
        steps=steps, first_masked_block=first_masked_block,
        mask_possible=mask_possible)

    parts = pl.pallas_call(
        kernel,
        out_shape=jax.ShapeDtypeStruct((splits, 3, SUBLANE, LANE), jnp.float32),
        grid=(splits, steps),
        in_specs=[pl.BlockSpec(block_of(block_units), in_map),
                  pl.BlockSpec(block_of(block_units), in_map)],
        out_specs=pl.BlockSpec((1, 3, SUBLANE, LANE), lambda c, i: (c, 0, 0, 0)),
        compiler_params=pltpu.CompilerParams(
            dimension_semantics=("parallel", "arbitrary")),
    )(x2, y2)

    inter += jnp.sum(parts[:, 0])
    sx += jnp.sum(parts[:, 1])
    sy += jnp.sum(parts[:, 2])
    return finish(inter, sx, sy)


def dice_loss_ref(inputs, targets, epsilon=1.0):
    x = inputs.reshape(-1).astype(jnp.float32)
    y = targets.reshape(-1).astype(jnp.float32)
    inter = jnp.sum(x * y)
    dice = (2.0 * inter + epsilon) / (jnp.sum(x) + jnp.sum(y) + epsilon)
    return 1.0 - dice


if __name__ == "__main__":
    epsilon = 1.0  # DiceLoss(epsilon) constructor arg
    key = jax.random.PRNGKey(0)
    k1, k2, k3, k4, k5, k6 = jax.random.split(key, 6)

    # Test 1: NCHW sigmoid "predictions" + binary targets; n % 1024 == 0 so
    # the zero-copy 3-D path runs (Pallas path forced via min_pallas_elems=0).
    shape1 = (2, 4, 16, 16)
    inputs1 = jax.nn.sigmoid(jax.random.normal(k1, shape1, dtype=jnp.float32))
    targets1 = (jax.random.uniform(k2, shape1) > 0.5).astype(jnp.float32)
    loss1 = jax.block_until_ready(
        dice_loss(inputs1, targets1, epsilon, min_pallas_elems=0))
    ref1 = dice_loss_ref(inputs1, targets1, epsilon)
    assert jnp.allclose(loss1, ref1, atol=1e-5, rtol=1e-5), (loss1, ref1)

    # Test 2: odd sizes + bf16 inputs exercise the 2-D ragged path, the
    # multi-block grid, the two-way split (phantom block) and tail masking.
    shape2 = (4, 4, 160, 113)
    inputs2 = jax.nn.sigmoid(
        jax.random.normal(k3, shape2, dtype=jnp.float32)).astype(jnp.bfloat16)
    targets2 = (jax.random.uniform(k4, shape2) > 0.5).astype(jnp.float32)
    loss2 = jax.block_until_ready(
        dice_loss(inputs2, targets2, epsilon, block_rows=256, num_splits=2,
                  min_pallas_elems=0))
    ref2 = dice_loss_ref(inputs2, targets2, epsilon)
    assert jnp.allclose(loss2, ref2, atol=1e-4, rtol=1e-4), (loss2, ref2)

    # Test 3: n % 128 != 0 exercises the tiny jnp remainder path + ragged rows.
    shape3 = (3, 5, 7, 11)
    inputs3 = jax.nn.sigmoid(jax.random.normal(k5, shape3, dtype=jnp.float32))
    targets3 = (jax.random.uniform(k6, shape3) > 0.5).astype(jnp.float32)
    loss3 = jax.block_until_ready(
        dice_loss(inputs3, targets3, epsilon, min_pallas_elems=0))
    ref3 = dice_loss_ref(inputs3, targets3, epsilon)
    assert jnp.allclose(loss3, ref3, atol=1e-5, rtol=1e-5), (loss3, ref3)

    # Test 4: default thresholds send small inputs down the plain-jnp fallback.
    loss4 = jax.block_until_ready(dice_loss(inputs1, targets1, epsilon))
    assert jnp.allclose(loss4, ref1, atol=1e-5, rtol=1e-5), (loss4, ref1)

    print("KERNEL_OK")
</pallas_src>

<mosaic_0001>
module attributes {stable_mosaic.version = 11 : i64} {
  func.func @_dice_kernel(%arg0: i32, %arg1: i32, %arg2: memref<2x8x128xf32, #tpu.memory_space<vmem>>, %arg3: memref<2x8x128xf32, #tpu.memory_space<vmem>>, %arg4: memref<1x3x8x128xf32, #tpu.memory_space<vmem>>) attributes {dimension_semantics = [#tpu.dimension_semantics<parallel>, #tpu.dimension_semantics<arbitrary>], iteration_bounds = array<i64: 1, 1>, scalar_prefetch = 0 : i64, scratch_operands = 0 : i64, tpu.core_type = #tpu.core_type<tc>, window_params = [{transform_indices = @transform_0, window_bounds = array<i64: 2, 8, 128>}, {transform_indices = @transform_1, window_bounds = array<i64: 2, 8, 128>}, {transform_indices = @transform_2, window_bounds = array<i64: 1, 3, 8, 128>}]} {
    %c0_i32 = arith.constant 0 : i32
    %0 = arith.cmpi eq, %arg1, %c0_i32 : i32
    %1 = arith.extui %0 : i1 to i32
    %c0_i32_0 = arith.constant 0 : i32
    %2 = arith.cmpi ne, %1, %c0_i32_0 : i32
    scf.if %2 {
      %cst_30 = arith.constant 0.000000e+00 : f32
      %27 = vector.broadcast %cst_30 : f32 to vector<1x3x8x128xf32>
      %c0_31 = arith.constant 0 : index
      %c0_32 = arith.constant 0 : index
      %c0_33 = arith.constant 0 : index
      %c0_34 = arith.constant 0 : index
      %28 = vector.load %arg4[%c0_31, %c0_32, %c0_33, %c0_34] : memref<1x3x8x128xf32, #tpu.memory_space<vmem>>, vector<1x3x8x128xf32>
      tpu.vector_store %arg4[%c0_31, %c0_32, %c0_33, %c0_34], %27 {strides = array<i32>} : memref<1x3x8x128xf32, #tpu.memory_space<vmem>>, vector<1x3x8x128xf32>,
    } else {
    }
    %c0 = arith.constant 0 : index
    %c0_1 = arith.constant 0 : index
    %c0_2 = arith.constant 0 : index
    %3 = vector.load %arg2[%c0, %c0_1, %c0_2] : memref<2x8x128xf32, #tpu.memory_space<vmem>>, vector<2x8x128xf32>
    %c0_3 = arith.constant 0 : index
    %c0_4 = arith.constant 0 : index
    %c0_5 = arith.constant 0 : index
    %4 = vector.load %arg3[%c0_3, %c0_4, %c0_5] : memref<2x8x128xf32, #tpu.memory_space<vmem>>, vector<2x8x128xf32>
    %c0_6 = arith.constant 0 : index
    %c0_7 = arith.constant 0 : index
    %c0_8 = arith.constant 0 : index
    %c0_9 = arith.constant 0 : index
    %5 = vector.load %arg4[%c0_6, %c0_7, %c0_8, %c0_9] : memref<1x3x8x128xf32, #tpu.memory_space<vmem>>, vector<1x1x8x128xf32>
    %6 = vector.shape_cast %5 : vector<1x1x8x128xf32> to vector<8x128xf32>
    %7 = arith.mulf %3, %4 : vector<2x8x128xf32>
    %cst = arith.constant dense<0.000000e+00> : vector<8x128xf32>
    %8 = vector.multi_reduction <add>, %7, %cst [0] : vector<2x8x128xf32> to vector<8x128xf32>
    %9 = arith.addf %6, %8 : vector<8x128xf32>
    %c0_10 = arith.constant 0 : index
    %c0_11 = arith.constant 0 : index
    %c0_12 = arith.constant 0 : index
    %c0_13 = arith.constant 0 : index
    %10 = vector.load %arg4[%c0_10, %c0_11, %c0_12, %c0_13] : memref<1x3x8x128xf32, #tpu.memory_space<vmem>>, vector<1x1x8x128xf32>
    %11 = vector.shape_cast %10 : vector<1x1x8x128xf32> to vector<8x128xf32>
    %12 = vector.shape_cast %9 : vector<8x128xf32> to vector<1x1x8x128xf32>
    tpu.vector_store %arg4[%c0_10, %c0_11, %c0_12, %c0_13], %12 {strides = array<i32>} : memref<1x3x8x128xf32, #tpu.memory_space<vmem>>, vector<1x1x8x128xf32>,
    %c0_14 = arith.constant 0 : index
    %c1 = arith.constant 1 : index
    %c0_15 = arith.constant 0 : index
    %c0_16 = arith.constant 0 : index
    %13 = vector.load %arg4[%c0_14, %c1, %c0_15, %c0_16] : memref<1x3x8x128xf32, #tpu.memory_space<vmem>>, vector<1x1x8x128xf32>
    %14 = vector.shape_cast %13 : vector<1x1x8x128xf32> to vector<8x128xf32>
    %cst_17 = arith.constant dense<0.000000e+00> : vector<8x128xf32>
    %15 = vector.multi_reduction <add>, %3, %cst_17 [0] : vector<2x8x128xf32> to vector<8x128xf32>
    %16 = arith.addf %14, %15 : vector<8x128xf32>
    %c0_18 = arith.constant 0 : index
    %c1_19 = arith.constant 1 : index
    %c0_20 = arith.constant 0 : index
    %c0_21 = arith.constant 0 : index
    %17 = vector.load %arg4[%c0_18, %c1_19, %c0_20, %c0_21] : memref<1x3x8x128xf32, #tpu.memory_space<vmem>>, vector<1x1x8x128xf32>
    %18 = vector.shape_cast %17 : vector<1x1x8x128xf32> to vector<8x128xf32>
    %19 = vector.shape_cast %16 : vector<8x128xf32> to vector<1x1x8x128xf32>
    tpu.vector_store %arg4[%c0_18, %c1_19, %c0_20, %c0_21], %19 {strides = array<i32>} : memref<1x3x8x128xf32, #tpu.memory_space<vmem>>, vector<1x1x8x128xf32>,
    %c0_22 = arith.constant 0 : index
    %c2 = arith.constant 2 : index
    %c0_23 = arith.constant 0 : index
    %c0_24 = arith.constant 0 : index
    %20 = vector.load %arg4[%c0_22, %c2, %c0_23, %c0_24] : memref<1x3x8x128xf32, #tpu.memory_space<vmem>>, vector<1x1x8x128xf32>
    %21 = vector.shape_cast %20 : vector<1x1x8x128xf32> to vector<8x128xf32>
    %cst_25 = arith.constant dense<0.000000e+00> : vector<8x128xf32>
    %22 = vector.multi_reduction <add>, %4, %cst_25 [0] : vector<2x8x128xf32> to vector<8x128xf32>
    %23 = arith.addf %21, %22 : vector<8x128xf32>
    %c0_26 = arith.constant 0 : index
    %c2_27 = arith.constant 2 : index
    %c0_28 = arith.constant 0 : index
    %c0_29 = arith.constant 0 : index
    %24 = vector.load %arg4[%c0_26, %c2_27, %c0_28, %c0_29] : memref<1x3x8x128xf32, #tpu.memory_space<vmem>>, vector<1x1x8x128xf32>
    %25 = vector.shape_cast %24 : vector<1x1x8x128xf32> to vector<8x128xf32>
    %26 = vector.shape_cast %23 : vector<8x128xf32> to vector<1x1x8x128xf32>
    tpu.vector_store %arg4[%c0_26, %c2_27, %c0_28, %c0_29], %26 {strides = array<i32>} : memref<1x3x8x128xf32, #tpu.memory_space<vmem>>, vector<1x1x8x128xf32>,
    return
  }
  func.func @transform_0(%arg0: i32, %arg1: i32) -> (i32, i32, i32) {
    %c1_i32 = arith.constant 1 : i32
    %0 = arith.muli %arg0, %c1_i32 : i32
    %1 = arith.addi %0, %arg1 : i32
    %c0_i32 = arith.constant 0 : i32
    %2 = arith.minsi %1, %c0_i32 : i32
    %c0_i32_0 = arith.constant 0 : i32
    %c0_i32_1 = arith.constant 0 : i32
    %c0_i32_2 = arith.constant 0 : i32
    return %2, %c0_i32_0, %c0_i32_1 : i32, i32, i32
  }
  func.func @transform_1(%arg0: i32, %arg1: i32) -> (i32, i32, i32) {
    %c1_i32 = arith.constant 1 : i32
    %0 = arith.muli %arg0, %c1_i32 : i32
    %1 = arith.addi %0, %arg1 : i32
    %c0_i32 = arith.constant 0 : i32
    %2 = arith.minsi %1, %c0_i32 : i32
    %c0_i32_0 = arith.constant 0 : i32
    %c0_i32_1 = arith.constant 0 : i32
    %c0_i32_2 = arith.constant 0 : i32
    return %2, %c0_i32_0, %c0_i32_1 : i32, i32, i32
  }
  func.func @transform_2(%arg0: i32, %arg1: i32) -> (i32, i32, i32, i32) {
    %c0_i32 = arith.constant 0 : i32
    %c0_i32_0 = arith.constant 0 : i32
    %c0_i32_1 = arith.constant 0 : i32
    %c0_i32_2 = arith.constant 0 : i32
    return %arg0, %c0_i32, %c0_i32_0, %c0_i32_1 : i32, i32, i32, i32
  }
}

</mosaic_0001>

<llo_original>
// kernel: tpu_custom_call.1
$region0: #{tpu_custom_call.1}
  #allocation0 [shape = 'u32[]', space=smem, size = 0x4, offset = 0x4, fixed_abs, tag = 'smem constant byte address 0x4 - core index']
  #allocation1 [shape = 'u32[144,128]{1,0:T(1,128)}', space=vmem, size = 0x12000, scoped, tag = 'internal scratch']
  %s0 = inlined_call_operand.hbm [shape: f32[2,8,128], index: 0, kind: input, shape index: {}]
  %s1 = inlined_call_operand.hbm [shape: f32[2,8,128], index: 1, kind: input, shape index: {}]
  %s2 = inlined_call_operand.hbm [shape: f32[1,3,8,128], index: 2, kind: output, shape index: {}]
  %s3 = sld [smem:[#allocation0]]
  $region30: #{tpu_custom_call.1} parent=0
    _
  %s5 = ssub.s32 1, %s3
  %s6 = scalar_select 0, %s5, %s3
  $region1: #{tpu_custom_call.1} parent=0
    #allocation2 [shape = 'u8[8192]{0}', space=vmem, size = 0x2000, scoped, tag = 'input window, operand 0, single buffered']
    #allocation3 [shape = 's32[1]{0}', space=sflag, size = 0x4, scoped, tag = 'scoped memory for tpu_custom_call.1']
    #allocation4 [shape = 's32[1]{0}', space=sflag, size = 0x4, scoped, tag = 'scoped memory for tpu_custom_call.1']
    #allocation5 [shape = 'u8[8192]{0}', space=vmem, size = 0x2000, scoped, tag = 'input window, operand 1, single buffered']
    #allocation6 [shape = 's32[1]{0}', space=sflag, size = 0x4, scoped, tag = 'scoped memory for tpu_custom_call.1']
    #allocation7 [shape = 'u8[12288]{0}', space=vmem, size = 0x3000, scoped, tag = 'output window, operand 0, single buffered']
    %7 = vsyncpa [#allocation3], 0
    %8 = vsyncpa [#allocation6], 0
    %9 = vsyncpa [#allocation4], 0
    // Predicated region
    $region2: #{tpu_custom_call.1} parent=1 // pred_check
      _
    $region3: #{tpu_custom_call.1} parent=1 // pred_check_branch
      %11 = sbr.rel (0) target = $region5
    $region4: #{tpu_custom_call.1} parent=1 // pred_region
      %s12 = sadd.s32 0, 0
      %p13 = scmp.lt.s32.totalorder %s12, 0
      %s14 = scalar_select %p13, %s12, 0
      %s15 = smul.u32 2, %s14
      %s17 = ssub.s32 256, 256
      %18 = vsyncadd [#allocation3], %s17
      %s19 = smul.addr %s15, 128
      %s20 = scalar_lea.hbm %s0, %s19
      %s21 = sshll.u32 [#allocation2], 4
      %s22 = int_to_ptr.vmem [resolvable:$true] %s21
      %27 = dma.hbm_to_vmem [thread:$0]  %s20, 256, %s22, [#allocation3], 128, 128, 8
    $region5: #{tpu_custom_call.1} parent=1 // pred_fallthru
      _
    // Predicated region
    $region6: #{tpu_custom_call.1} parent=1 // pred_check
      _
    $region7: #{tpu_custom_call.1} parent=1 // pred_check_branch
      %29 = sbr.rel (0) target = $region9
    $region8: #{tpu_custom_call.1} parent=1 // pred_region
      %s30 = sadd.s32 0, 0
      %p31 = scmp.lt.s32.totalorder %s30, 0
      %s32 = scalar_select %p31, %s30, 0
      %s33 = smul.u32 2, %s32
      %s35 = ssub.s32 256, 256
      %36 = vsyncadd [#allocation6], %s35
      %s37 = smul.addr %s33, 128
      %s38 = scalar_lea.hbm %s1, %s37
      %s39 = sshll.u32 [#allocation5], 4
      %s40 = int_to_ptr.vmem [resolvable:$true] %s39
      %45 = dma.hbm_to_vmem [thread:$0]  %s38, 256, %s40, [#allocation6], 128, 128, 8
    $region9: #{tpu_custom_call.1} parent=1 // pred_fallthru
      _
    // Predicated region
    $region10: #{tpu_custom_call.1} parent=1 // pred_check
      _
    $region11: #{tpu_custom_call.1} parent=1 // pred_check_branch
      %47 = sbr.rel (0) target = $region13
    $region12: #{tpu_custom_call.1} parent=1 // pred_region
      %48 = dma.done [#allocation3], 256
    $region13: #{tpu_custom_call.1} parent=1 // pred_fallthru
      _
    // Predicated region
    $region14: #{tpu_custom_call.1} parent=1 // pred_check
      _
    $region15: #{tpu_custom_call.1} parent=1 // pred_check_branch
      %50 = sbr.rel (0) target = $region17
    $region16: #{tpu_custom_call.1} parent=1 // pred_region
      %51 = dma.done [#allocation6], 256
    $region17: #{tpu_custom_call.1} parent=1 // pred_fallthru
      _
    %s52 = sadd.s32 0, 0
    %p53 = scmp.lt.s32.totalorder %s52, 0
    %s54 = scalar_select %p53, %s52, 0
    %s55 = smul.u32 2, %s54
    %s56 = sadd.s32 0, 0
    %p57 = scmp.lt.s32.totalorder %s56, 0
    %s58 = scalar_select %p57, %s56, 0
    %s59 = smul.u32 2, %s58
    %p60 = scmp.eq.s32.totalorder 0, 0
    // Predicated region
    $region18: #{tpu_custom_call.1} parent=1 // pred_check
      %p61 = pneg %p60
    $region19: #{tpu_custom_call.1} parent=1 // pred_check_branch
      %63 = sbr.rel (%p61) target = $region21
    $region20: #{tpu_custom_call.1} parent=1 // pred_region
      %64 = vst [vmem:[#allocation7] sm:$0xff] 0.0
      %65 = vst [vmem:[#allocation7 + $0x8] sm:$0xff] 0.0
      %66 = vst [vmem:[#allocation7 + $0x10] sm:$0xff] 0.0
    $region21: #{tpu_custom_call.1} parent=1 // pred_fallthru
      _
    %v67 = vld [vmem:[#allocation2] sm:$0xff]
    %v68 = vld [vmem:[#allocation2 + $0x8] sm:$0xff]
    %v69 = vld [vmem:[#allocation5] sm:$0xff]
    %v70 = vld [vmem:[#allocation5 + $0x8] sm:$0xff]
    %v71 = vld [vmem:[#allocation7] sm:$0xff]
    %v72 = vmul.f32 %v67, %v69
    %v73 = vmul.f32 %v68, %v70
    %v74 = vadd.f32 %v72, %v73
    %v75 = vadd.f32 %v71, %v74
    %76 = vst [vmem:[#allocation7] sm:$0xff] %v75
    %s77 = scalar_lea.vmem [#allocation7], 8
    %v78 = vld [vmem:[%s77] sm:$0xff]
    %v79 = vadd.f32 %v67, %v68
    %v80 = vadd.f32 %v78, %v79
    %81 = vst [vmem:[%s77] sm:$0xff] %v80
    %s82 = scalar_lea.vmem [#allocation7], 16
    %v83 = vld [vmem:[%s82] sm:$0xff]
    %v84 = vadd.f32 %v69, %v70
    %v85 = vadd.f32 %v83, %v84
    %86 = vst [vmem:[%s82] sm:$0xff] %v85
    // Predicated region
    $region22: #{tpu_custom_call.1} parent=1 // pred_check
      _
    $region23: #{tpu_custom_call.1} parent=1 // pred_check_branch
      %88 = sbr.rel (0) target = $region25
    $region24: #{tpu_custom_call.1} parent=1 // pred_region
      %s90 = ssub.s32 384, 384
      %91 = vsyncadd [#allocation4], %s90
      %s92 = sshll.u32 [#allocation7], 4
      %s93 = int_to_ptr.vmem [resolvable:$true] %s92
      %98 = dma.vmem_to_hbm [thread:$0]  %s93, 384, %s2, [#allocation4], 128, 128, 8
    $region25: #{tpu_custom_call.1} parent=1 // pred_fallthru
      _
    // Predicated region
    $region26: #{tpu_custom_call.1} parent=1 // pred_check
      _
    $region27: #{tpu_custom_call.1} parent=1 // pred_check_branch
      %100 = sbr.rel (0) target = $region29
    $region28: #{tpu_custom_call.1} parent=1 // pred_region
      %101 = dma.done [#allocation4], 384
    $region29: #{tpu_custom_call.1} parent=1 // pred_fallthru
      _
    %102 = vsyncpa [#allocation3], 1
    %103 = vsyncpa [#allocation6], 1
    %104 = vsyncpa [#allocation4], 1

</llo_original>
